<compile_context>
chip_gen: v7x
topology: tpu7x:2x2x1
jax: 0.10.0
libtpu: 0.0.40
codegen_flags: <defaults>
</compile_context>

<pallas_src>
import functools

import jax
import jax.numpy as jnp
from jax.experimental import pallas as pl
from jax.experimental.pallas import tpu as pltpu


_LANE = 128   # lane-dense padded width for all hidden/output dims
_KPAD = 16    # K padding granularity (bf16-friendly weight-slab offsets)
_ROW = 8      # batch-tile granularity (f32 sublane)


def _round_up(x, m):
    return ((x + m - 1) // m) * m


# ---------------------------------------------------------------------------
# Kernel
# ---------------------------------------------------------------------------
def _mlp_kernel(x_ref, w_ref, b_ref, out_ref, *, kin_pad, row_offs):
    """Fused 5-layer MLP on one (BM, kin_pad) batch tile.

    x_ref  : (BM, kin_pad)            f32   flattened (K-zero-padded) inputs
    w_ref  : (kin_pad + 4*128, 128)   bf16  5 weights stacked row-wise, each
                                            zero-padded to 128 output lanes
    b_ref  : (8, 128)                 f32   rows 0..4 hold zero-padded biases
    out_ref: (BM, 128)                f32   lane-dense; logits in [:, :size_out]
    """
    row_sizes = (kin_pad, _LANE, _LANE, _LANE, _LANE)
    h = x_ref[...].astype(jnp.bfloat16)                  # cast in-kernel (free VPU slack)
    for layer in range(5):
        w = w_ref[pl.ds(row_offs[layer], row_sizes[layer]), :]
        b = b_ref[pl.ds(layer, 1), :]
        y = jnp.dot(h, w, preferred_element_type=jnp.float32) + b
        if layer < 4:
            h = jnp.maximum(y, 0.0).astype(jnp.bfloat16)
        else:
            out_ref[...] = y


# ---------------------------------------------------------------------------
# Parameter construction / packing (one-time, hoisted out of the forward)
# ---------------------------------------------------------------------------
def init_params(size_in, size_out, key):
    """Deterministic synthetic parameters (normal approx. of trunc-normal init)."""
    dims = [(size_in, 64), (64, 128), (128, 128), (128, 20), (20, size_out)]
    params = []
    for fan_in, fan_out in dims:
        kw, kb, key = jax.random.split(key, 3)
        std = (2.0 / fan_in) ** 0.5
        w = std * jax.random.normal(kw, (fan_in, fan_out), dtype=jnp.float32)
        b = 0.01 * jax.random.normal(kb, (1, fan_out), dtype=jnp.float32)
        params.append((w, b))
    return params


def pack_params(params, size_in):
    """Pack all weights into one (K_total, 128) bf16 slab, biases into (8, 128) f32.

    Call ONCE (outside the per-step forward path)."""
    kin_pad = _round_up(size_in, _KPAD)
    row_pads = [kin_pad, _LANE, _LANE, _LANE, _LANE]
    w_blocks, b_rows = [], []
    for (w, b), rp in zip(params, row_pads):
        fan_in, fan_out = w.shape
        wp = jnp.zeros((rp, _LANE), jnp.float32).at[:fan_in, :fan_out].set(w)
        bp = jnp.zeros((1, _LANE), jnp.float32).at[:, :fan_out].set(b)
        w_blocks.append(wp)
        b_rows.append(bp)
    w_packed = jnp.concatenate(w_blocks, axis=0).astype(jnp.bfloat16)
    b_packed = jnp.concatenate(
        b_rows + [jnp.zeros((8 - len(b_rows), _LANE), jnp.float32)], axis=0)
    return w_packed, b_packed


# ---------------------------------------------------------------------------
# Tile-size / VMEM-budget selection (generation aware)
# ---------------------------------------------------------------------------
def _vmem_capacity_bytes():
    try:
        return int(pltpu.get_tpu_info().vmem_capacity_bytes)
    except Exception:
        return 64 << 20          # conservative (v7x-sized) fallback


def _choose_bm(B, kin_pad, param_bytes, vmem_cap):
    # Large tiles amortize per-grid-step overhead (~0.35us) and MXU fill/drain,
    # but keep >=4 grid steps for large B so v7x's 2 TCs both get work.
    bm = min(1024, _round_up(max(pl.cdiv(B, 4), 1), _ROW))
    bm = min(bm, _round_up(B, _ROW))                     # never exceed the batch
    # Fit in VMEM: double-buffered f32 x tile + f32 out tile + resident params
    # (params are double-buffered by the default pipeline).
    budget = max(vmem_cap - (8 << 20), 8 << 20)
    per_row = 2 * kin_pad * 4 + 2 * _LANE * 4
    bm_fit = max(_ROW, int((budget - 2 * param_bytes) // per_row) // _ROW * _ROW)
    return max(_ROW, min(bm, bm_fit))


# ---------------------------------------------------------------------------
# Forward wrapper (matches N_net_back.forward: returns (logits, u))
# ---------------------------------------------------------------------------
@functools.partial(jax.jit, static_argnames=("size_out",))
def n_net_back_forward(x, w_packed, b_packed, *, size_out):
    B = x.shape[0]
    x_flat = x.reshape(B, -1).astype(jnp.float32)        # nn.Flatten()
    size_in = x_flat.shape[1]
    kin_pad = w_packed.shape[0] - 4 * _LANE

    # Only pad the K direction (zero fill) when size_in isn't already aligned;
    # no batch-row padding and no extra bf16 copy of x.
    if size_in < kin_pad:
        x_flat = jnp.pad(x_flat, ((0, 0), (0, kin_pad - size_in)))

    param_bytes = int(w_packed.size) * 2 + int(b_packed.size) * 4
    vmem_cap = _vmem_capacity_bytes()
    BM = _choose_bm(B, kin_pad, param_bytes, vmem_cap)
    grid = (pl.cdiv(B, BM),)

    row_offs = (0, kin_pad, kin_pad + _LANE, kin_pad + 2 * _LANE, kin_pad + 3 * _LANE)
    kernel = functools.partial(_mlp_kernel, kin_pad=kin_pad, row_offs=row_offs)

    need = (2 * BM * kin_pad * 4          # x tiles (f32, double-buffered)
            + 2 * BM * _LANE * 4          # out tiles (f32, double-buffered)
            + 2 * param_bytes)            # packed params (double-buffered)
    vmem_limit = int(min(max(need + (4 << 20), 16 << 20), vmem_cap - (4 << 20)))

    y_pad = pl.pallas_call(
        kernel,
        out_shape=jax.ShapeDtypeStruct((B, _LANE), jnp.float32),
        grid_spec=pltpu.PrefetchScalarGridSpec(
            num_scalar_prefetch=0,
            grid=grid,
            in_specs=[
                pl.BlockSpec((BM, kin_pad), lambda i: (i, 0)),   # x tile (streamed)
                pl.BlockSpec(w_packed.shape, lambda i: (0, 0)),  # packed W (resident)
                pl.BlockSpec(b_packed.shape, lambda i: (0, 0)),  # packed b (resident)
            ],
            out_specs=pl.BlockSpec((BM, _LANE), lambda i: (i, 0)),
        ),
        compiler_params=pltpu.CompilerParams(
            dimension_semantics=("parallel",),
            vmem_limit_bytes=vmem_limit),
    )(x_flat, w_packed, b_packed)

    y = y_pad[:, :size_out]
    u = jnp.array([0.5], dtype=jnp.float32)
    return y, u


# ---------------------------------------------------------------------------
# References
# ---------------------------------------------------------------------------
def _reference_f32(x, params):
    h = x.reshape(x.shape[0], -1).astype(jnp.float32)
    for i, (w, b) in enumerate(params):
        h = h @ w + b
        if i < len(params) - 1:
            h = jnp.maximum(h, 0.0)
    return h


def _reference_bf16(x, params):
    """Reference that mirrors the kernel's bf16-operand / f32-accumulate scheme."""
    h = x.reshape(x.shape[0], -1).astype(jnp.bfloat16)
    out = None
    for i, (w, b) in enumerate(params):
        y = jnp.dot(h, w.astype(jnp.bfloat16),
                    preferred_element_type=jnp.float32) + b
        if i < len(params) - 1:
            h = jnp.maximum(y, 0.0).astype(jnp.bfloat16)
        else:
            out = y
    return out


if __name__ == "__main__":
    key = jax.random.PRNGKey(0)
    kx, kp = jax.random.split(key)

    # small shapes implied by the module: Flatten -> Linear(size_in, 64)
    B, C, S = 8, 4, 8            # x: (8, 4, 8) -> flattened size_in = 32
    size_in = C * S
    size_out = 16

    x = jax.random.normal(kx, (B, C, S), dtype=jnp.float32)
    params = init_params(size_in, size_out, kp)

    # One-time parameter packing, hoisted out of the forward path.
    w_packed, b_packed = pack_params(params, size_in)
    w_packed = jax.block_until_ready(w_packed)
    b_packed = jax.block_until_ready(b_packed)

    y, u = n_net_back_forward(x, w_packed, b_packed, size_out=size_out)
    y = jax.block_until_ready(y)
    u = jax.block_until_ready(u)

    y_ref_bf16 = _reference_bf16(x, params)
    y_ref_f32 = _reference_f32(x, params)

    assert y.shape == (B, size_out)
    assert u.shape == (1,) and float(u[0]) == 0.5
    # bf16-matched reference: should agree closely
    assert jnp.allclose(y, y_ref_bf16, atol=1e-2, rtol=1e-2), \
        float(jnp.max(jnp.abs(y - y_ref_bf16)))
    # f32 reference: loose tolerance (bf16 matmul operands)
    assert jnp.allclose(y, y_ref_f32, atol=1e-1, rtol=1e-1), \
        float(jnp.max(jnp.abs(y - y_ref_f32)))

    print("KERNEL_OK")
</pallas_src>

<mosaic_0001>
module attributes {stable_mosaic.version = 11 : i64} {
  func.func @_mlp_kernel(%arg0: i32, %arg1: memref<8x32xf32, #tpu.memory_space<vmem>>, %arg2: memref<544x128xbf16, #tpu.memory_space<vmem>>, %arg3: memref<8x128xf32, #tpu.memory_space<vmem>>, %arg4: memref<8x128xf32, #tpu.memory_space<vmem>>) attributes {dimension_semantics = [#tpu.dimension_semantics<parallel>], iteration_bounds = array<i64: 1>, scalar_prefetch = 0 : i64, scratch_operands = 0 : i64, tpu.core_type = #tpu.core_type<tc>, window_params = [{transform_indices = @transform_0, window_bounds = array<i64: 8, 32>}, {pipeline_mode = #tpu.pipeline_mode<synchronous>, transform_indices = @transform_1, window_bounds = array<i64: 544, 128>}, {pipeline_mode = #tpu.pipeline_mode<synchronous>, transform_indices = @transform_2, window_bounds = array<i64: 8, 128>}, {transform_indices = @transform_3, window_bounds = array<i64: 8, 128>}]} {
    %c0 = arith.constant 0 : index
    %c0_0 = arith.constant 0 : index
    %0 = vector.load %arg1[%c0, %c0_0] : memref<8x32xf32, #tpu.memory_space<vmem>>, vector<8x32xf32>
    %1 = arith.truncf %0 : vector<8x32xf32> to vector<8x32xbf16>
    %c0_1 = arith.constant 0 : index
    %c0_2 = arith.constant 0 : index
    %2 = vector.load %arg2[%c0_1, %c0_2] : memref<544x128xbf16, #tpu.memory_space<vmem>>, vector<32x128xbf16>
    %c0_3 = arith.constant 0 : index
    %c0_4 = arith.constant 0 : index
    %3 = vector.load %arg3[%c0_3, %c0_4] : memref<8x128xf32, #tpu.memory_space<vmem>>, vector<1x128xf32>
    %cst = arith.constant dense<0.000000e+00> : vector<8x128xf32>
    %4 = tpu.matmul %1, %2, %cst {dimension_numbers = #tpu.dot_dimension_numbers<[1], [0], [0], [1], [0, 0, 1, 1], [], []>} : vector<8x32xbf16>, vector<32x128xbf16>, vector<8x128xf32> -> vector<8x128xf32>
    %5 = vector.broadcast %3 : vector<1x128xf32> to vector<8x128xf32>
    %6 = arith.addf %4, %5 : vector<8x128xf32>
    %cst_5 = arith.constant 0.000000e+00 : f32
    %7 = vector.broadcast %cst_5 : f32 to vector<8x128xf32>
    %8 = arith.maximumf %6, %7 : vector<8x128xf32>
    %9 = arith.truncf %8 : vector<8x128xf32> to vector<8x128xbf16>
    %c32 = arith.constant 32 : index
    %c0_6 = arith.constant 0 : index
    %10 = vector.load %arg2[%c32, %c0_6] : memref<544x128xbf16, #tpu.memory_space<vmem>>, vector<128x128xbf16>
    %c1 = arith.constant 1 : index
    %c0_7 = arith.constant 0 : index
    %11 = vector.load %arg3[%c1, %c0_7] : memref<8x128xf32, #tpu.memory_space<vmem>>, vector<1x128xf32>
    %cst_8 = arith.constant dense<0.000000e+00> : vector<8x128xf32>
    %12 = tpu.matmul %9, %10, %cst_8 {dimension_numbers = #tpu.dot_dimension_numbers<[1], [0], [0], [1], [0, 0, 1, 1], [], []>} : vector<8x128xbf16>, vector<128x128xbf16>, vector<8x128xf32> -> vector<8x128xf32>
    %13 = vector.broadcast %11 : vector<1x128xf32> to vector<8x128xf32>
    %14 = arith.addf %12, %13 : vector<8x128xf32>
    %cst_9 = arith.constant 0.000000e+00 : f32
    %15 = vector.broadcast %cst_9 : f32 to vector<8x128xf32>
    %16 = arith.maximumf %14, %15 : vector<8x128xf32>
    %17 = arith.truncf %16 : vector<8x128xf32> to vector<8x128xbf16>
    %c160 = arith.constant 160 : index
    %c0_10 = arith.constant 0 : index
    %18 = vector.load %arg2[%c160, %c0_10] : memref<544x128xbf16, #tpu.memory_space<vmem>>, vector<128x128xbf16>
    %c2 = arith.constant 2 : index
    %c0_11 = arith.constant 0 : index
    %19 = vector.load %arg3[%c2, %c0_11] : memref<8x128xf32, #tpu.memory_space<vmem>>, vector<1x128xf32>
    %cst_12 = arith.constant dense<0.000000e+00> : vector<8x128xf32>
    %20 = tpu.matmul %17, %18, %cst_12 {dimension_numbers = #tpu.dot_dimension_numbers<[1], [0], [0], [1], [0, 0, 1, 1], [], []>} : vector<8x128xbf16>, vector<128x128xbf16>, vector<8x128xf32> -> vector<8x128xf32>
    %21 = vector.broadcast %19 : vector<1x128xf32> to vector<8x128xf32>
    %22 = arith.addf %20, %21 : vector<8x128xf32>
    %cst_13 = arith.constant 0.000000e+00 : f32
    %23 = vector.broadcast %cst_13 : f32 to vector<8x128xf32>
    %24 = arith.maximumf %22, %23 : vector<8x128xf32>
    %25 = arith.truncf %24 : vector<8x128xf32> to vector<8x128xbf16>
    %c288 = arith.constant 288 : index
    %c0_14 = arith.constant 0 : index
    %26 = vector.load %arg2[%c288, %c0_14] : memref<544x128xbf16, #tpu.memory_space<vmem>>, vector<128x128xbf16>
    %c3 = arith.constant 3 : index
    %c0_15 = arith.constant 0 : index
    %27 = vector.load %arg3[%c3, %c0_15] : memref<8x128xf32, #tpu.memory_space<vmem>>, vector<1x128xf32>
    %cst_16 = arith.constant dense<0.000000e+00> : vector<8x128xf32>
    %28 = tpu.matmul %25, %26, %cst_16 {dimension_numbers = #tpu.dot_dimension_numbers<[1], [0], [0], [1], [0, 0, 1, 1], [], []>} : vector<8x128xbf16>, vector<128x128xbf16>, vector<8x128xf32> -> vector<8x128xf32>
    %29 = vector.broadcast %27 : vector<1x128xf32> to vector<8x128xf32>
    %30 = arith.addf %28, %29 : vector<8x128xf32>
    %cst_17 = arith.constant 0.000000e+00 : f32
    %31 = vector.broadcast %cst_17 : f32 to vector<8x128xf32>
    %32 = arith.maximumf %30, %31 : vector<8x128xf32>
    %33 = arith.truncf %32 : vector<8x128xf32> to vector<8x128xbf16>
    %c416 = arith.constant 416 : index
    %c0_18 = arith.constant 0 : index
    %34 = vector.load %arg2[%c416, %c0_18] : memref<544x128xbf16, #tpu.memory_space<vmem>>, vector<128x128xbf16>
    %c4 = arith.constant 4 : index
    %c0_19 = arith.constant 0 : index
    %35 = vector.load %arg3[%c4, %c0_19] : memref<8x128xf32, #tpu.memory_space<vmem>>, vector<1x128xf32>
    %cst_20 = arith.constant dense<0.000000e+00> : vector<8x128xf32>
    %36 = tpu.matmul %33, %34, %cst_20 {dimension_numbers = #tpu.dot_dimension_numbers<[1], [0], [0], [1], [0, 0, 1, 1], [], []>} : vector<8x128xbf16>, vector<128x128xbf16>, vector<8x128xf32> -> vector<8x128xf32>
    %37 = vector.broadcast %35 : vector<1x128xf32> to vector<8x128xf32>
    %38 = arith.addf %36, %37 : vector<8x128xf32>
    %c0_21 = arith.constant 0 : index
    %c0_22 = arith.constant 0 : index
    %39 = vector.load %arg4[%c0_21, %c0_22] : memref<8x128xf32, #tpu.memory_space<vmem>>, vector<8x128xf32>
    tpu.vector_store %arg4[%c0_21, %c0_22], %38 {strides = array<i32>} : memref<8x128xf32, #tpu.memory_space<vmem>>, vector<8x128xf32>,
    return
  }
  func.func @transform_0(%arg0: i32) -> (i32, i32) {
    %c0_i32 = arith.constant 0 : i32
    %c0_i32_0 = arith.constant 0 : i32
    return %arg0, %c0_i32 : i32, i32
  }
  func.func @transform_1(%arg0: i32) -> (i32, i32) {
    %c0_i32 = arith.constant 0 : i32
    %c0_i32_0 = arith.constant 0 : i32
    %c0_i32_1 = arith.constant 0 : i32
    return %c0_i32, %c0_i32_0 : i32, i32
  }
  func.func @transform_2(%arg0: i32) -> (i32, i32) {
    %c0_i32 = arith.constant 0 : i32
    %c0_i32_0 = arith.constant 0 : i32
    %c0_i32_1 = arith.constant 0 : i32
    return %c0_i32, %c0_i32_0 : i32, i32
  }
  func.func @transform_3(%arg0: i32) -> (i32, i32) {
    %c0_i32 = arith.constant 0 : i32
    %c0_i32_0 = arith.constant 0 : i32
    return %arg0, %c0_i32 : i32, i32
  }
}

</mosaic_0001>

<llo_original>
// kernel: n_net_back_forward.1
$region0: #{n_net_back_forward.1}
  #allocation0 [shape = 'u32[]', space=smem, size = 0x4, offset = 0x4, fixed_abs, tag = 'smem constant byte address 0x4 - core index']
  #allocation1 [shape = 'u32[144,128]{1,0:T(1,128)}', space=vmem, size = 0x12000, scoped, tag = 'internal scratch']
  %s0 = inlined_call_operand.vmem [shape: f32[8,32], index: 0, kind: input, shape index: {}]
  %s1 = inlined_call_operand.hbm [shape: bf16[544,128], index: 1, kind: input, shape index: {}]
  %s2 = inlined_call_operand.vmem [shape: f32[8,128], index: 2, kind: input, shape index: {}]
  %s3 = inlined_call_operand.hbm [shape: f32[8,128], index: 3, kind: output, shape index: {}]
  %s4 = sld [smem:[#allocation0]]
  $region26: #{n_net_back_forward.1} parent=0
    _
  %s6 = ssub.s32 1, %s4
  %s7 = scalar_select 0, %s6, %s4
  $region1: #{n_net_back_forward.1} parent=0
    #allocation2 [shape = 'u8[139264]{0}', space=vmem, size = 0x22000, scoped, tag = 'input window, operand 1, single buffered']
    #allocation3 [shape = 's32[1]{0}', space=sflag, size = 0x4, scoped, tag = 'scoped memory for n_net_back_forward.1']
    #allocation4 [shape = 's32[1]{0}', space=sflag, size = 0x4, scoped, tag = 'scoped memory for n_net_back_forward.1']
    #allocation5 [shape = 'u8[4096]{0}', space=vmem, size = 0x1000, scoped, tag = 'output window, operand 0, single buffered']
    %8 = vsyncpa [#allocation3], 0
    %9 = vsyncpa [#allocation4], 0
    // Predicated region
    $region2: #{n_net_back_forward.1} parent=1 // pred_check
      _
    $region3: #{n_net_back_forward.1} parent=1 // pred_check_branch
      %11 = sbr.rel (0) target = $region5
    $region4: #{n_net_back_forward.1} parent=1 // pred_region
      _
    $region5: #{n_net_back_forward.1} parent=1 // pred_fallthru
      _
    // Predicated region
    $region6: #{n_net_back_forward.1} parent=1 // pred_check
      _
    $region7: #{n_net_back_forward.1} parent=1 // pred_check_branch
      %13 = sbr.rel (0) target = $region9
    $region8: #{n_net_back_forward.1} parent=1 // pred_region
      %s15 = ssub.s32 4352, 4352
      %16 = vsyncadd [#allocation3], %s15
      %s17 = sshll.u32 [#allocation2], 4
      %s18 = int_to_ptr.vmem [resolvable:$true] %s17
      %23 = dma.hbm_to_vmem [thread:$0]  %s1, 4352, %s18, [#allocation3], 64, 64, 4
    $region9: #{n_net_back_forward.1} parent=1 // pred_fallthru
      _
    // Predicated region
    $region10: #{n_net_back_forward.1} parent=1 // pred_check
      _
    $region11: #{n_net_back_forward.1} parent=1 // pred_check_branch
      %25 = sbr.rel (0) target = $region13
    $region12: #{n_net_back_forward.1} parent=1 // pred_region
      _
    $region13: #{n_net_back_forward.1} parent=1 // pred_fallthru
      _
    // Predicated region
    $region14: #{n_net_back_forward.1} parent=1 // pred_check
      _
    $region15: #{n_net_back_forward.1} parent=1 // pred_check_branch
      %27 = sbr.rel (0) target = $region17
    $region16: #{n_net_back_forward.1} parent=1 // pred_region
      %28 = dma.done [#allocation3], 4352
    $region17: #{n_net_back_forward.1} parent=1 // pred_fallthru
      _
    %v30 = vld [vmem:[%s0] sm:$0xff]
    %v31 = vpack.c.bf16 %v30, %v30
    %v32 = vld [vmem:[#allocation2] sm:$0xf]
    %v33 = vld [vmem:[#allocation2 + $0x4] sm:$0xf]
    %v34 = vld [vmem:[#allocation2 + $0x8] sm:$0xf]
    %v35 = vld [vmem:[#allocation2 + $0xc] sm:$0xf]
    %v36 = vld [vmem:[%s2] sm:$0x1]
    %v37 = vlaneseq
    %v38 = vshrl.u32 %v37, 7
    %v39 = vsub.s32 0, %v38
    %v40 = vrot.slane %v36, %v39
    %v45 = vunpack.c.l.b16 %v32
    %v46 = vunpack.c.l.b16 %v33
    %v47 = vunpack.c.l.b16 %v34
    %v48 = vunpack.c.l.b16 %v35
    %v49 = vpack.c.b16 %v46, %v45
    %v50 = vpack.c.b16 %v48, %v47
    %vm53 = vcmask 261120
    %v55 = vsel %vm53, %v31, 0
    %57 = vmatprep.subr.bf16.mxu0 0
    %58 = vmatpush1.bf16.msra.mxu0 %v49
    %59 = vmatprep.subr.bf16.mxu0 0
    %60 = vmatpush1.bf16.msra.mxu0 %v50
    %61 = vmatprep.subr.bf16.mxu0 0
    %62 = vmatpush1.bf16.msra.mxu0 0
    %63 = vmatprep.subr.bf16.mxu0 0
    %64 = vmatpush1.bf16.msra.mxu0 0
    %65 = vmatprep.subr.bf16.mxu0 0
    %66 = vmatpush1.bf16.msra.mxu0 0
    %67 = vmatprep.subr.bf16.mxu0 0
    %68 = vmatpush1.bf16.msra.mxu0 0
    %69 = vmatprep.subr.bf16.mxu0 0
    %70 = vmatpush1.bf16.msra.mxu0 0
    %71 = vmatprep.subr.bf16.mxu0 0
    %72 = vmatpush1.bf16.msra.mxu0 0
    %73 = vmatprep.subr.bf16.mxu0 0
    %74 = vmatpush1.bf16.msra.mxu0 0
    %75 = vmatprep.subr.bf16.mxu0 0
    %76 = vmatpush1.bf16.msra.mxu0 0
    %77 = vmatprep.subr.bf16.mxu0 0
    %78 = vmatpush1.bf16.msra.mxu0 0
    %79 = vmatprep.subr.bf16.mxu0 0
    %80 = vmatpush1.bf16.msra.mxu0 0
    %81 = vmatprep.subr.bf16.mxu0 0
    %82 = vmatpush1.bf16.msra.mxu0 0
    %83 = vmatprep.subr.bf16.mxu0 0
    %84 = vmatpush1.bf16.msra.mxu0 0
    %85 = vmatprep.subr.bf16.mxu0 0
    %86 = vmatpush1.bf16.msra.mxu0 0
    %87 = vmatprep.subr.bf16.mxu0 0
    %88 = vmatpush1.bf16.msra.mxu0 0
    %89 = vmatprep.mubr.bf16.mxu0 0
    %90 = vmatmul.mubr.bf16.gmra.mrb[0].mxu0 %v55
    %v91 = vpop.f32.mrb[0].mxu0
    %v92 = vadd.f32 %v40, %v91
    %v93 = vpop.f32.mrb[0].mxu0
    %v94 = vpop.f32.mrb[0].mxu0
    %v95 = vpop.f32.mrb[0].mxu0
    %96 = vdwg.mxu0
    %v97 = vmax.f32 %v92, 0.0
    %v98 = vpack.c.bf16 %v97, %v97
    %v99 = vld [vmem:[#allocation2 + $0x10] sm:$0xf]
    %v100 = vld [vmem:[#allocation2 + $0x14] sm:$0xf]
    %v101 = vld [vmem:[#allocation2 + $0x18] sm:$0xf]
    %v102 = vld [vmem:[#allocation2 + $0x1c] sm:$0xf]
    %v103 = vld [vmem:[#allocation2 + $0x20] sm:$0xf]
    %v104 = vld [vmem:[#allocation2 + $0x24] sm:$0xf]
    %v105 = vld [vmem:[#allocation2 + $0x28] sm:$0xf]
    %v106 = vld [vmem:[#allocation2 + $0x2c] sm:$0xf]
    %v107 = vld [vmem:[#allocation2 + $0x30] sm:$0xf]
    %v108 = vld [vmem:[#allocation2 + $0x34] sm:$0xf]
    %v109 = vld [vmem:[#allocation2 + $0x38] sm:$0xf]
    %v110 = vld [vmem:[#allocation2 + $0x3c] sm:$0xf]
    %v111 = vld [vmem:[#allocation2 + $0x40] sm:$0xf]
    %v112 = vld [vmem:[#allocation2 + $0x44] sm:$0xf]
    %v113 = vld [vmem:[#allocation2 + $0x48] sm:$0xf]
    %v114 = vld [vmem:[#allocation2 + $0x4c] sm:$0xf]
    %v115 = vld [vmem:[%s2 + $0x1] sm:$0x1]
    %v116 = vlaneseq
    %v117 = vshrl.u32 %v116, 7
    %v118 = vsub.s32 0, %v117
    %v119 = vrot.slane %v115, %v118
    %v136 = vunpack.c.l.b16 %v99
    %v137 = vunpack.c.l.b16 %v100
    %v138 = vunpack.c.l.b16 %v101
    %v139 = vunpack.c.l.b16 %v102
    %v140 = vunpack.c.l.b16 %v103
    %v141 = vunpack.c.l.b16 %v104
    %v142 = vunpack.c.l.b16 %v105
    %v143 = vunpack.c.l.b16 %v106
    %v144 = vunpack.c.l.b16 %v107
    %v145 = vunpack.c.l.b16 %v108
    %v146 = vunpack.c.l.b16 %v109
    %v147 = vunpack.c.l.b16 %v110
    %v148 = vunpack.c.l.b16 %v111
    %v149 = vunpack.c.l.b16 %v112
    %v150 = vunpack.c.l.b16 %v113
    %v151 = vunpack.c.l.b16 %v114
    %v152 = vpack.c.b16 %v137, %v136
    %v153 = vpack.c.b16 %v139, %v138
    %v154 = vpack.c.b16 %v141, %v140
    %v155 = vpack.c.b16 %v143, %v142
    %v156 = vpack.c.b16 %v145, %v144
    %v157 = vpack.c.b16 %v147, %v146
    %v158 = vpack.c.b16 %v149, %v148
    %v159 = vpack.c.b16 %v151, %v150
    %168 = vmatprep.subr.bf16.mxu0 0
    %169 = vmatpush1.bf16.msra.mxu0 %v152
    %170 = vmatprep.subr.bf16.mxu0 0
    %171 = vmatpush1.bf16.msra.mxu0 %v153
    %172 = vmatprep.subr.bf16.mxu0 0
    %173 = vmatpush1.bf16.msra.mxu0 %v154
    %174 = vmatprep.subr.bf16.mxu0 0
    %175 = vmatpush1.bf16.msra.mxu0 %v155
    %176 = vmatprep.subr.bf16.mxu0 0
    %177 = vmatpush1.bf16.msra.mxu0 %v156
    %178 = vmatprep.subr.bf16.mxu0 0
    %179 = vmatpush1.bf16.msra.mxu0 %v157
    %180 = vmatprep.subr.bf16.mxu0 0
    %181 = vmatpush1.bf16.msra.mxu0 %v158
    %182 = vmatprep.subr.bf16.mxu0 0
    %183 = vmatpush1.bf16.msra.mxu0 %v159
    %184 = vmatprep.subr.bf16.mxu0 0
    %185 = vmatpush1.bf16.msra.mxu0 0
    %186 = vmatprep.subr.bf16.mxu0 0
    %187 = vmatpush1.bf16.msra.mxu0 0
    %188 = vmatprep.subr.bf16.mxu0 0
    %189 = vmatpush1.bf16.msra.mxu0 0
    %190 = vmatprep.subr.bf16.mxu0 0
    %191 = vmatpush1.bf16.msra.mxu0 0
    %192 = vmatprep.subr.bf16.mxu0 0
    %193 = vmatpush1.bf16.msra.mxu0 0
    %194 = vmatprep.subr.bf16.mxu0 0
    %195 = vmatpush1.bf16.msra.mxu0 0
    %196 = vmatprep.subr.bf16.mxu0 0
    %197 = vmatpush1.bf16.msra.mxu0 0
    %198 = vmatprep.subr.bf16.mxu0 0
    %199 = vmatpush1.bf16.msra.mxu0 0
    %200 = vmatprep.mubr.bf16.mxu0 0
    %201 = vmatmul.mubr.bf16.gmra.mrb[0].mxu0 %v98
    %v202 = vpop.f32.mrb[0].mxu0
    %v203 = vadd.f32 %v119, %v202
    %v204 = vpop.f32.mrb[0].mxu0
    %v205 = vpop.f32.mrb[0].mxu0
    %v206 = vpop.f32.mrb[0].mxu0
    %207 = vdwg.mxu0
    %v208 = vmax.f32 %v203, 0.0
    %v209 = vpack.c.bf16 %v208, %v208
    %v210 = vld [vmem:[#allocation2 + $0x50] sm:$0xf]
    %v211 = vld [vmem:[#allocation2 + $0x54] sm:$0xf]
    %v212 = vld [vmem:[#allocation2 + $0x58] sm:$0xf]
    %v213 = vld [vmem:[#allocation2 + $0x5c] sm:$0xf]
    %v214 = vld [vmem:[#allocation2 + $0x60] sm:$0xf]
    %v215 = vld [vmem:[#allocation2 + $0x64] sm:$0xf]
    %v216 = vld [vmem:[#allocation2 + $0x68] sm:$0xf]
    %v217 = vld [vmem:[#allocation2 + $0x6c] sm:$0xf]
    %v218 = vld [vmem:[#allocation2 + $0x70] sm:$0xf]
    %v219 = vld [vmem:[#allocation2 + $0x74] sm:$0xf]
    %v220 = vld [vmem:[#allocation2 + $0x78] sm:$0xf]
    %v221 = vld [vmem:[#allocation2 + $0x7c] sm:$0xf]
    %v222 = vld [vmem:[#allocation2 + $0x80] sm:$0xf]
    %v223 = vld [vmem:[#allocation2 + $0x84] sm:$0xf]
    %v224 = vld [vmem:[#allocation2 + $0x88] sm:$0xf]
    %v225 = vld [vmem:[#allocation2 + $0x8c] sm:$0xf]
    %v226 = vld [vmem:[%s2 + $0x2] sm:$0x1]
    %v227 = vlaneseq
    %v228 = vshrl.u32 %v227, 7
    %v229 = vsub.s32 0, %v228
    %v230 = vrot.slane %v226, %v229
    %v247 = vunpack.c.l.b16 %v210
    %v248 = vunpack.c.l.b16 %v211
    %v249 = vunpack.c.l.b16 %v212
    %v250 = vunpack.c.l.b16 %v213
    %v251 = vunpack.c.l.b16 %v214
    %v252 = vunpack.c.l.b16 %v215
    %v253 = vunpack.c.l.b16 %v216
    %v254 = vunpack.c.l.b16 %v217
    %v255 = vunpack.c.l.b16 %v218
    %v256 = vunpack.c.l.b16 %v219
    %v257 = vunpack.c.l.b16 %v220
    %v258 = vunpack.c.l.b16 %v221
    %v259 = vunpack.c.l.b16 %v222
    %v260 = vunpack.c.l.b16 %v223
    %v261 = vunpack.c.l.b16 %v224
    %v262 = vunpack.c.l.b16 %v225
    %v263 = vpack.c.b16 %v248, %v247
    %v264 = vpack.c.b16 %v250, %v249
    %v265 = vpack.c.b16 %v252, %v251
    %v266 = vpack.c.b16 %v254, %v253
    %v267 = vpack.c.b16 %v256, %v255
    %v268 = vpack.c.b16 %v258, %v257
    %v269 = vpack.c.b16 %v260, %v259
    %v270 = vpack.c.b16 %v262, %v261
    %279 = vmatprep.subr.bf16.mxu0 0
    %280 = vmatpush1.bf16.msra.mxu0 %v263
    %281 = vmatprep.subr.bf16.mxu0 0
    %282 = vmatpush1.bf16.msra.mxu0 %v264
    %283 = vmatprep.subr.bf16.mxu0 0
    %284 = vmatpush1.bf16.msra.mxu0 %v265
    %285 = vmatprep.subr.bf16.mxu0 0
    %286 = vmatpush1.bf16.msra.mxu0 %v266
    %287 = vmatprep.subr.bf16.mxu0 0
    %288 = vmatpush1.bf16.msra.mxu0 %v267
    %289 = vmatprep.subr.bf16.mxu0 0
    %290 = vmatpush1.bf16.msra.mxu0 %v268
    %291 = vmatprep.subr.bf16.mxu0 0
    %292 = vmatpush1.bf16.msra.mxu0 %v269
    %293 = vmatprep.subr.bf16.mxu0 0
    %294 = vmatpush1.bf16.msra.mxu0 %v270
    %295 = vmatprep.subr.bf16.mxu0 0
    %296 = vmatpush1.bf16.msra.mxu0 0
    %297 = vmatprep.subr.bf16.mxu0 0
    %298 = vmatpush1.bf16.msra.mxu0 0
    %299 = vmatprep.subr.bf16.mxu0 0
    %300 = vmatpush1.bf16.msra.mxu0 0
    %301 = vmatprep.subr.bf16.mxu0 0
    %302 = vmatpush1.bf16.msra.mxu0 0
    %303 = vmatprep.subr.bf16.mxu0 0
    %304 = vmatpush1.bf16.msra.mxu0 0
    %305 = vmatprep.subr.bf16.mxu0 0
    %306 = vmatpush1.bf16.msra.mxu0 0
    %307 = vmatprep.subr.bf16.mxu0 0
    %308 = vmatpush1.bf16.msra.mxu0 0
    %309 = vmatprep.subr.bf16.mxu0 0
    %310 = vmatpush1.bf16.msra.mxu0 0
    %311 = vmatprep.mubr.bf16.mxu0 0
    %312 = vmatmul.mubr.bf16.gmra.mrb[0].mxu0 %v209
    %v313 = vpop.f32.mrb[0].mxu0
    %v314 = vadd.f32 %v230, %v313
    %v315 = vpop.f32.mrb[0].mxu0
    %v316 = vpop.f32.mrb[0].mxu0
    %v317 = vpop.f32.mrb[0].mxu0
    %318 = vdwg.mxu0
    %v319 = vmax.f32 %v314, 0.0
    %v320 = vpack.c.bf16 %v319, %v319
    %v321 = vld [vmem:[#allocation2 + $0x90] sm:$0xf]
    %v322 = vld [vmem:[#allocation2 + $0x94] sm:$0xf]
    %v323 = vld [vmem:[#allocation2 + $0x98] sm:$0xf]
    %v324 = vld [vmem:[#allocation2 + $0x9c] sm:$0xf]
    %v325 = vld [vmem:[#allocation2 + $0xa0] sm:$0xf]
    %v326 = vld [vmem:[#allocation2 + $0xa4] sm:$0xf]
    %v327 = vld [vmem:[#allocation2 + $0xa8] sm:$0xf]
    %v328 = vld [vmem:[#allocation2 + $0xac] sm:$0xf]
    %v329 = vld [vmem:[#allocation2 + $0xb0] sm:$0xf]
    %v330 = vld [vmem:[#allocation2 + $0xb4] sm:$0xf]
    %v331 = vld [vmem:[#allocation2 + $0xb8] sm:$0xf]
    %v332 = vld [vmem:[#allocation2 + $0xbc] sm:$0xf]
    %v333 = vld [vmem:[#allocation2 + $0xc0] sm:$0xf]
    %v334 = vld [vmem:[#allocation2 + $0xc4] sm:$0xf]
    %v335 = vld [vmem:[#allocation2 + $0xc8] sm:$0xf]
    %v336 = vld [vmem:[#allocation2 + $0xcc] sm:$0xf]
    %v337 = vld [vmem:[%s2 + $0x3] sm:$0x1]
    %v338 = vlaneseq
    %v339 = vshrl.u32 %v338, 7
    %v340 = vsub.s32 0, %v339
    %v341 = vrot.slane %v337, %v340
    %v358 = vunpack.c.l.b16 %v321
    %v359 = vunpack.c.l.b16 %v322
    %v360 = vunpack.c.l.b16 %v323
    %v361 = vunpack.c.l.b16 %v324
    %v362 = vunpack.c.l.b16 %v325
    %v363 = vunpack.c.l.b16 %v326
    %v364 = vunpack.c.l.b16 %v327
    %v365 = vunpack.c.l.b16 %v328
    %v366 = vunpack.c.l.b16 %v329
    %v367 = vunpack.c.l.b16 %v330
    %v368 = vunpack.c.l.b16 %v331
    %v369 = vunpack.c.l.b16 %v332
    %v370 = vunpack.c.l.b16 %v333
    %v371 = vunpack.c.l.b16 %v334
    %v372 = vunpack.c.l.b16 %v335
    %v373 = vunpack.c.l.b16 %v336
    %v374 = vpack.c.b16 %v359, %v358
    %v375 = vpack.c.b16 %v361, %v360
    %v376 = vpack.c.b16 %v363, %v362
    %v377 = vpack.c.b16 %v365, %v364
    %v378 = vpack.c.b16 %v367, %v366
    %v379 = vpack.c.b16 %v369, %v368
    %v380 = vpack.c.b16 %v371, %v370
    %v381 = vpack.c.b16 %v373, %v372
    %390 = vmatprep.subr.bf16.mxu0 0
    %391 = vmatpush1.bf16.msra.mxu0 %v374
    %392 = vmatprep.subr.bf16.mxu0 0
    %393 = vmatpush1.bf16.msra.mxu0 %v375
    %394 = vmatprep.subr.bf16.mxu0 0
    %395 = vmatpush1.bf16.msra.mxu0 %v376
    %396 = vmatprep.subr.bf16.mxu0 0
    %397 = vmatpush1.bf16.msra.mxu0 %v377
    %398 = vmatprep.subr.bf16.mxu0 0
    %399 = vmatpush1.bf16.msra.mxu0 %v378
    %400 = vmatprep.subr.bf16.mxu0 0
    %401 = vmatpush1.bf16.msra.mxu0 %v379
    %402 = vmatprep.subr.bf16.mxu0 0
    %403 = vmatpush1.bf16.msra.mxu0 %v380
    %404 = vmatprep.subr.bf16.mxu0 0
    %405 = vmatpush1.bf16.msra.mxu0 %v381
    %406 = vmatprep.subr.bf16.mxu0 0
    %407 = vmatpush1.bf16.msra.mxu0 0
    %408 = vmatprep.subr.bf16.mxu0 0
    %409 = vmatpush1.bf16.msra.mxu0 0
    %410 = vmatprep.subr.bf16.mxu0 0
    %411 = vmatpush1.bf16.msra.mxu0 0
    %412 = vmatprep.subr.bf16.mxu0 0
    %413 = vmatpush1.bf16.msra.mxu0 0
    %414 = vmatprep.subr.bf16.mxu0 0
    %415 = vmatpush1.bf16.msra.mxu0 0
    %416 = vmatprep.subr.bf16.mxu0 0
    %417 = vmatpush1.bf16.msra.mxu0 0
    %418 = vmatprep.subr.bf16.mxu0 0
    %419 = vmatpush1.bf16.msra.mxu0 0
    %420 = vmatprep.subr.bf16.mxu0 0
    %421 = vmatpush1.bf16.msra.mxu0 0
    %422 = vmatprep.mubr.bf16.mxu0 0
    %423 = vmatmul.mubr.bf16.gmra.mrb[0].mxu0 %v320
    %v424 = vpop.f32.mrb[0].mxu0
    %v425 = vadd.f32 %v341, %v424
    %v426 = vpop.f32.mrb[0].mxu0
    %v427 = vpop.f32.mrb[0].mxu0
    %v428 = vpop.f32.mrb[0].mxu0
    %429 = vdwg.mxu0
    %v430 = vmax.f32 %v425, 0.0
    %v431 = vpack.c.bf16 %v430, %v430
    %v432 = vld [vmem:[#allocation2 + $0xd0] sm:$0xf]
    %v433 = vld [vmem:[#allocation2 + $0xd4] sm:$0xf]
    %v434 = vld [vmem:[#allocation2 + $0xd8] sm:$0xf]
    %v435 = vld [vmem:[#allocation2 + $0xdc] sm:$0xf]
    %v436 = vld [vmem:[#allocation2 + $0xe0] sm:$0xf]
    %v437 = vld [vmem:[#allocation2 + $0xe4] sm:$0xf]
    %v438 = vld [vmem:[#allocation2 + $0xe8] sm:$0xf]
    %v439 = vld [vmem:[#allocation2 + $0xec] sm:$0xf]
    %v440 = vld [vmem:[#allocation2 + $0xf0] sm:$0xf]
    %v441 = vld [vmem:[#allocation2 + $0xf4] sm:$0xf]
    %v442 = vld [vmem:[#allocation2 + $0xf8] sm:$0xf]
    %v443 = vld [vmem:[#allocation2 + $0xfc] sm:$0xf]
    %v444 = vld [vmem:[#allocation2 + $0x100] sm:$0xf]
    %v445 = vld [vmem:[#allocation2 + $0x104] sm:$0xf]
    %v446 = vld [vmem:[#allocation2 + $0x108] sm:$0xf]
    %v447 = vld [vmem:[#allocation2 + $0x10c] sm:$0xf]
    %v448 = vld [vmem:[%s2 + $0x4] sm:$0x1]
    %v449 = vlaneseq
    %v450 = vshrl.u32 %v449, 7
    %v451 = vsub.s32 0, %v450
    %v452 = vrot.slane %v448, %v451
    %v469 = vunpack.c.l.b16 %v432
    %v470 = vunpack.c.l.b16 %v433
    %v471 = vunpack.c.l.b16 %v434
    %v472 = vunpack.c.l.b16 %v435
    %v473 = vunpack.c.l.b16 %v436
    %v474 = vunpack.c.l.b16 %v437
    %v475 = vunpack.c.l.b16 %v438
    %v476 = vunpack.c.l.b16 %v439
    %v477 = vunpack.c.l.b16 %v440
    %v478 = vunpack.c.l.b16 %v441
    %v479 = vunpack.c.l.b16 %v442
    %v480 = vunpack.c.l.b16 %v443
    %v481 = vunpack.c.l.b16 %v444
    %v482 = vunpack.c.l.b16 %v445
    %v483 = vunpack.c.l.b16 %v446
    %v484 = vunpack.c.l.b16 %v447
    %v485 = vpack.c.b16 %v470, %v469
    %v486 = vpack.c.b16 %v472, %v471
    %v487 = vpack.c.b16 %v474, %v473
    %v488 = vpack.c.b16 %v476, %v475
    %v489 = vpack.c.b16 %v478, %v477
    %v490 = vpack.c.b16 %v480, %v479
    %v491 = vpack.c.b16 %v482, %v481
    %v492 = vpack.c.b16 %v484, %v483
    %501 = vmatprep.subr.bf16.mxu0 0
    %502 = vmatpush1.bf16.msra.mxu0 %v485
    %503 = vmatprep.subr.bf16.mxu0 0
    %504 = vmatpush1.bf16.msra.mxu0 %v486
    %505 = vmatprep.subr.bf16.mxu0 0
    %506 = vmatpush1.bf16.msra.mxu0 %v487
    %507 = vmatprep.subr.bf16.mxu0 0
    %508 = vmatpush1.bf16.msra.mxu0 %v488
    %509 = vmatprep.subr.bf16.mxu0 0
    %510 = vmatpush1.bf16.msra.mxu0 %v489
    %511 = vmatprep.subr.bf16.mxu0 0
    %512 = vmatpush1.bf16.msra.mxu0 %v490
    %513 = vmatprep.subr.bf16.mxu0 0
    %514 = vmatpush1.bf16.msra.mxu0 %v491
    %515 = vmatprep.subr.bf16.mxu0 0
    %516 = vmatpush1.bf16.msra.mxu0 %v492
    %517 = vmatprep.subr.bf16.mxu0 0
    %518 = vmatpush1.bf16.msra.mxu0 0
    %519 = vmatprep.subr.bf16.mxu0 0
    %520 = vmatpush1.bf16.msra.mxu0 0
    %521 = vmatprep.subr.bf16.mxu0 0
    %522 = vmatpush1.bf16.msra.mxu0 0
    %523 = vmatprep.subr.bf16.mxu0 0
    %524 = vmatpush1.bf16.msra.mxu0 0
    %525 = vmatprep.subr.bf16.mxu0 0
    %526 = vmatpush1.bf16.msra.mxu0 0
    %527 = vmatprep.subr.bf16.mxu0 0
    %528 = vmatpush1.bf16.msra.mxu0 0
    %529 = vmatprep.subr.bf16.mxu0 0
    %530 = vmatpush1.bf16.msra.mxu0 0
    %531 = vmatprep.subr.bf16.mxu0 0
    %532 = vmatpush1.bf16.msra.mxu0 0
    %533 = vmatprep.mubr.bf16.mxu0 0
    %534 = vmatmul.mubr.bf16.gmra.mrb[0].mxu0 %v431
    %v535 = vpop.f32.mrb[0].mxu0
    %v536 = vadd.f32 %v452, %v535
    %v537 = vpop.f32.mrb[0].mxu0
    %v538 = vpop.f32.mrb[0].mxu0
    %v539 = vpop.f32.mrb[0].mxu0
    %540 = vdwg.mxu0
    %541 = vst [vmem:[#allocation5] sm:$0xff] %v536
    // Predicated region
    $region18: #{n_net_back_forward.1} parent=1 // pred_check
      _
    $region19: #{n_net_back_forward.1} parent=1 // pred_check_branch
      %543 = sbr.rel (0) target = $region21
    $region20: #{n_net_back_forward.1} parent=1 // pred_region
      %s545 = ssub.s32 128, 128
      %546 = vsyncadd [#allocation4], %s545
      %s548 = sshll.u32 [#allocation5], 4
      %s549 = int_to_ptr.vmem [resolvable:$true] %s548
      %551 = dma.vmem_to_hbm [thread:$0]  %s549, 128, %s3, [#allocation4]
    $region21: #{n_net_back_forward.1} parent=1 // pred_fallthru
      _
    // Predicated region
    $region22: #{n_net_back_forward.1} parent=1 // pred_check
      _
    $region23: #{n_net_back_forward.1} parent=1 // pred_check_branch
      %553 = sbr.rel (0) target = $region25
    $region24: #{n_net_back_forward.1} parent=1 // pred_region
      %554 = dma.done [#allocation4], 128
    $region25: #{n_net_back_forward.1} parent=1 // pred_fallthru
      _
    %555 = vsyncpa [#allocation3], 1
    %556 = vsyncpa [#allocation4], 1

</llo_original>
